<compile_context>
chip_gen: v7x
topology: tpu7x:2x2x1
jax: 0.10.0
libtpu: 0.0.40
codegen_flags: <defaults>
</compile_context>

<pallas_src>
import functools
import math

import jax
import jax.numpy as jnp
from jax.experimental import pallas as pl
from jax.experimental.pallas import tpu as pltpu


def _gabor_kernel(xa_ref, rhs_ref, o_ref, *, lp):
    """One batch tile: out = exp(min(prod[:, :lp], 0)) * sin(prod[:, lp:])."""
    xa = xa_ref[...]        # (TB, F+2)   f32
    rhs = rhs_ref[...]      # (F+2, 2Lp)  f32  (grid-invariant fused slab)

    # Single MXU push: left half = Gaussian exponent, right half = lin + phase.
    prod = jnp.dot(xa, rhs, preferred_element_type=jnp.float32)   # (TB, 2Lp)
    expo = jnp.minimum(prod[:, :lp], 0.0)    # d2 >= 0  =>  exponent <= 0
    o_ref[...] = (jnp.exp(expo) * jnp.sin(prod[:, lp:])).astype(o_ref.dtype)


def gabor_filter(x, freqs, mu, gamma, phase, *, weight_scale, tb=512,
                 out_dtype=jnp.float32):
    """Pallas implementation of GaborFilter.forward.

    x: (B, F), freqs/mu: (F, L), gamma/phase: (L,). Returns (B, L) out_dtype.
    """
    B, F = x.shape
    _, L = freqs.shape

    x = x.astype(jnp.float32)
    freqs = freqs.astype(jnp.float32)
    mu = mu.astype(jnp.float32)
    gamma2 = gamma.reshape(1, L).astype(jnp.float32)
    phase2 = phase.reshape(1, L).astype(jnp.float32)

    # ---- grid-invariant precomputation (one-time XLA ops) ----
    sqrt_gamma = jnp.sqrt(gamma2)                                   # gamma >= 0 assumed
    w = (2.0 * math.pi * float(weight_scale)) * freqs * sqrt_gamma  # (F, L)
    a = mu * gamma2                                                 # (F, L)
    mu2 = jnp.sum(mu * mu, axis=0, keepdims=True)                   # (1, L)
    g = -0.5 * gamma2                                               # (1, L)
    c = -0.5 * gamma2 * mu2                                         # (1, L)

    # Lane-pad each half of the fused slab so the in-kernel static slices fall
    # on (8,128) tile boundaries and the output stays lane-dense.
    Lp = ((L + 127) // 128) * 128
    a_half = jnp.concatenate([a, g, c], axis=0)                     # (F+2, L)
    w_half = jnp.concatenate([w, jnp.zeros((1, L), jnp.float32), phase2], axis=0)
    if Lp != L:
        a_half = jnp.pad(a_half, ((0, 0), (0, Lp - L)))
        w_half = jnp.pad(w_half, ((0, 0), (0, Lp - L)))
    rhs = jnp.concatenate([a_half, w_half], axis=1)                 # (F+2, 2Lp)

    # Augmented activations: [x | x2 | 1]  (B, F+2)
    x2 = jnp.sum(x * x, axis=-1, keepdims=True)                     # (B, 1)
    x_aug = jnp.concatenate([x, x2, jnp.ones((B, 1), jnp.float32)], axis=1)
    K = F + 2

    # ---- batch tiling: multiple of 8 sublanes, pad ragged remainder ----
    tb_eff = max(8, (min(int(tb), B) // 8) * 8)
    Bp = ((B + tb_eff - 1) // tb_eff) * tb_eff
    if Bp >= 16:
        # Keep the "parallel" grid at >= 2 steps so both v7x TensorCores get
        # work (harmless on single-TC v5e/v6e).
        half = ((Bp // 2) // 8) * 8
        if half >= 8:
            tb_eff = min(tb_eff, half)
            Bp = ((B + tb_eff - 1) // tb_eff) * tb_eff
    if Bp != B:
        x_aug = jnp.pad(x_aug, ((0, Bp - B), (0, 0)))   # zero rows -> out rows = 0

    n_steps = Bp // tb_eff

    # ---- VMEM headroom: only needed for very large tiles (v5e 16 MiB default).
    bpe = 4
    vmem_est = (2 * tb_eff * max(K, 128) * bpe          # x_aug double-buffer (lane-padded)
                + 2 * tb_eff * Lp * bpe                  # out double-buffer
                + 2 * ((K + 7) // 8) * 8 * 2 * Lp * bpe)  # rhs double-buffer
    vmem_limit = int(min(vmem_est * 2, 96 * 1024 * 1024)) if vmem_est > (12 << 20) else None

    cost = pl.CostEstimate(
        flops=2 * Bp * K * 2 * Lp,
        transcendentals=2 * Bp * Lp,                     # exp + sin per output element
        bytes_accessed=bpe * (Bp * K + Bp * Lp + K * 2 * Lp),
    )

    grid_spec = pltpu.PrefetchScalarGridSpec(
        num_scalar_prefetch=0,
        grid=(n_steps,),
        in_specs=[
            pl.BlockSpec((tb_eff, K), lambda i: (i, 0)),       # x_aug tile
            pl.BlockSpec((K, 2 * Lp), lambda i: (0, 0)),       # fused weight slab
        ],
        out_specs=pl.BlockSpec((tb_eff, Lp), lambda i: (i, 0)),
    )

    out = pl.pallas_call(
        functools.partial(_gabor_kernel, lp=Lp),
        out_shape=jax.ShapeDtypeStruct((Bp, Lp), out_dtype),
        grid_spec=grid_spec,
        compiler_params=pltpu.CompilerParams(
            dimension_semantics=("parallel",),
            vmem_limit_bytes=vmem_limit),
        cost_estimate=cost,
    )(x_aug, rhs)

    return out[:B, :L]


def gabor_filter_reference(x, freqs, mu, gamma, phase, *, weight_scale):
    """Plain-JAX transcription of the PyTorch forward (for verification)."""
    frequency = weight_scale * (freqs * jnp.sqrt(gamma))         # (F, L)
    x_c = x[..., None] - mu                                      # (B, F, L)
    x_c = jnp.sum(jnp.square(x_c), axis=-2)                      # (B, L)
    x_c = jnp.exp(-0.5 * x_c * gamma)
    return x_c * jnp.sin(jnp.matmul(x, 2.0 * math.pi * frequency) + phase)


if __name__ == "__main__":
    # module hyper-parameters (deterministic, in-script)
    in_features = 4
    layer_size = 128
    nr_layers = 3
    input_scale = 256.0
    alpha, beta = 6.0, 1.0
    weight_scale = input_scale / math.sqrt(nr_layers + 1)

    B = 16  # small test batch (pads/tiles to two grid steps of 8)

    key = jax.random.PRNGKey(0)
    k_x, k_freqs, k_phase, k_mu, k_gamma = jax.random.split(key, 5)

    # inputs
    x = jax.random.normal(k_x, (B, in_features), dtype=jnp.float32)
    # `freqs` input plays the role of the (xavier-initialized) frequency param
    bound = math.sqrt(6.0 / (in_features + layer_size))
    freqs = jax.random.uniform(k_freqs, (in_features, layer_size),
                               minval=-bound, maxval=bound, dtype=jnp.float32)

    # parameters (deterministic init mirroring reset_parameters)
    phase = jax.random.uniform(k_phase, (layer_size,),
                               minval=-math.pi, maxval=math.pi, dtype=jnp.float32)
    mu = jax.random.uniform(k_mu, (in_features, layer_size),
                            minval=-1.0, maxval=1.0, dtype=jnp.float32)
    gamma = (jax.random.gamma(k_gamma, alpha, (layer_size,)) / beta).astype(jnp.float32)

    out = gabor_filter(x, freqs, mu, gamma, phase, weight_scale=weight_scale)
    out = jax.block_until_ready(out)

    ref = gabor_filter_reference(x, freqs, mu, gamma, phase, weight_scale=weight_scale)
    assert out.shape == (B, layer_size)
    max_err = float(jnp.max(jnp.abs(out - ref)))
    assert jnp.allclose(out, ref, rtol=2e-4, atol=2e-4), (
        f"mismatch vs reference (max abs err {max_err})")

    print("KERNEL_OK")
</pallas_src>

<mosaic_0001>
module attributes {stable_mosaic.version = 11 : i64} {
  func.func @_gabor_kernel(%arg0: i32, %arg1: memref<8x6xf32, #tpu.memory_space<vmem>>, %arg2: memref<6x256xf32, #tpu.memory_space<vmem>>, %arg3: memref<8x128xf32, #tpu.memory_space<vmem>>) attributes {dimension_semantics = [#tpu.dimension_semantics<parallel>], iteration_bounds = array<i64: 2>, scalar_prefetch = 0 : i64, scratch_operands = 0 : i64, tpu.core_type = #tpu.core_type<tc>, window_params = [{transform_indices = @transform_0, window_bounds = array<i64: 8, 6>}, {pipeline_mode = #tpu.pipeline_mode<synchronous>, transform_indices = @transform_1, window_bounds = array<i64: 6, 256>}, {transform_indices = @transform_2, window_bounds = array<i64: 8, 128>}]} {
    %c0 = arith.constant 0 : index
    %c0_0 = arith.constant 0 : index
    %0 = vector.load %arg1[%c0, %c0_0] : memref<8x6xf32, #tpu.memory_space<vmem>>, vector<8x6xf32>
    %c0_1 = arith.constant 0 : index
    %c0_2 = arith.constant 0 : index
    %1 = vector.load %arg2[%c0_1, %c0_2] : memref<6x256xf32, #tpu.memory_space<vmem>>, vector<6x256xf32>
    %cst = arith.constant dense<0.000000e+00> : vector<8x256xf32>
    %2 = tpu.matmul %0, %1, %cst {dimension_numbers = #tpu.dot_dimension_numbers<[1], [0], [0], [1], [0, 0, 1, 1], [], []>} : vector<8x6xf32>, vector<6x256xf32>, vector<8x256xf32> -> vector<8x256xf32>
    %3 = vector.extract_strided_slice %2 {offsets = [0, 0], sizes = [8, 128], strides = [1, 1]} : vector<8x256xf32> to vector<8x128xf32>
    %cst_3 = arith.constant 0.000000e+00 : f32
    %4 = vector.broadcast %cst_3 : f32 to vector<8x128xf32>
    %5 = arith.minimumf %3, %4 : vector<8x128xf32>
    %6 = math.exp %5 : vector<8x128xf32>
    %7 = vector.extract_strided_slice %2 {offsets = [0, 128], sizes = [8, 128], strides = [1, 1]} : vector<8x256xf32> to vector<8x128xf32>
    %8 = math.sin %7 : vector<8x128xf32>
    %9 = arith.mulf %6, %8 : vector<8x128xf32>
    %c0_4 = arith.constant 0 : index
    %c0_5 = arith.constant 0 : index
    %10 = vector.load %arg3[%c0_4, %c0_5] : memref<8x128xf32, #tpu.memory_space<vmem>>, vector<8x128xf32>
    tpu.vector_store %arg3[%c0_4, %c0_5], %9 {strides = array<i32>} : memref<8x128xf32, #tpu.memory_space<vmem>>, vector<8x128xf32>,
    return
  }
  func.func @transform_0(%arg0: i32) -> (i32, i32) {
    %c0_i32 = arith.constant 0 : i32
    %c0_i32_0 = arith.constant 0 : i32
    return %arg0, %c0_i32 : i32, i32
  }
  func.func @transform_1(%arg0: i32) -> (i32, i32) {
    %c0_i32 = arith.constant 0 : i32
    %c0_i32_0 = arith.constant 0 : i32
    %c0_i32_1 = arith.constant 0 : i32
    return %c0_i32, %c0_i32_0 : i32, i32
  }
  func.func @transform_2(%arg0: i32) -> (i32, i32) {
    %c0_i32 = arith.constant 0 : i32
    %c0_i32_0 = arith.constant 0 : i32
    return %arg0, %c0_i32 : i32, i32
  }
}

</mosaic_0001>

<llo_original>
// kernel: tpu_custom_call.1
$region0: #{tpu_custom_call.1}
  #allocation0 [shape = 'u32[]', space=smem, size = 0x4, offset = 0x4, fixed_abs, tag = 'smem constant byte address 0x4 - core index']
  #allocation1 [shape = 'u32[144,128]{1,0:T(1,128)}', space=vmem, size = 0x12000, scoped, tag = 'internal scratch']
  %s0 = inlined_call_operand.vmem [shape: f32[16,6], index: 0, kind: input, shape index: {}]
  %s1 = inlined_call_operand.vmem [shape: f32[6,256], index: 1, kind: input, shape index: {}]
  %s2 = inlined_call_operand.hbm [shape: f32[16,128], index: 2, kind: output, shape index: {}]
  %s3 = sld [smem:[#allocation0]]
  $region41: #{tpu_custom_call.1} parent=0
    _
  %s5 = ssub.s32 1, %s3
  %s6 = scalar_select 0, %s5, %s3
  $region1: #{tpu_custom_call.1} parent=0
    #allocation2 [shape = 'u8[8192]{0}', space=vmem, size = 0x2000, scoped, tag = 'output window, operand 0']
    #allocation3 [shape = 's32[2]{0}', space=sflag, size = 0x8, scoped, tag = 'scoped memory for tpu_custom_call.1']
    %7 = vsyncpa [#allocation3], 0
    %s8 = scalar_lea.sflag [#allocation3], 1
    %9 = vsyncpa %s8, 0
    loop: start=0, step=1, limit=4
    $region2: #{tpu_custom_call.1} parent=1 // loop_pre_header
      _
    $region3: #{tpu_custom_call.1} parent=1 // loop_header
      %s11 = sphi 0, %s15
      %p12 = scmp.ge.s32.totalorder %s11, 4
      %s21 = sphi 0, %s23
      %s24 = sphi 0, %s21
      %s25 = sphi 0, %s24
      %s41 = sphi 0, %s25
      %s45 = sphi 0, %s45
      %s47 = sphi 0, %s45
      %s48 = sphi 0, %s47
      %s62 = sphi 0, %s48
      %s68 = sphi 0, %s70
      %s71 = sphi 0, %s68
      %s72 = sphi 0, %s71
      %s88 = sphi 0, %s72
    $region4: #{tpu_custom_call.1} parent=1 // loop_header_branch
      %14 = sbr.rel (%p12) target = $region8
    $region5: #{tpu_custom_call.1} parent=1 // loop_body
      %s16 = ssub.s32 %s11, 1
      %s17 = ssub.s32 %s11, 2
      %s18 = sadd.s32 %s11, 1
      %s19 = ssub.s32 %s11, %s18
      %p20 = scmp.eq.s32.totalorder %s19, 0
      %s22 = sadd.s32 %s21, 1
      %s23 = scalar_select %p20, %s21, %s22
      %p26 = pneg %p20
      %p27 = scmp.eq.s32.totalorder %s11, 1
      %p28 = por %p26, %p27
      %p29 = scmp.ne.s32.totalorder %s21, %s24
      %p30 = scmp.eq.s32.totalorder %s11, 0
      %p31 = por %p29, %p30
      %p32 = scmp.ne.s32.totalorder %s21, %s24
      %p33 = scmp.eq.s32.totalorder %s16, 1
      %p34 = por %p32, %p33
      %p35 = scmp.ne.s32.totalorder %s24, %s25
      %p36 = scmp.eq.s32.totalorder %s16, 0
      %p37 = por %p35, %p36
      %p38 = scmp.ne.s32.totalorder %s24, %s25
      %p39 = scmp.eq.s32.totalorder %s17, 1
      %p40 = por %p38, %p39
      %p42 = scmp.ne.s32.totalorder %s25, %s41
      %p43 = scmp.eq.s32.totalorder %s17, 0
      %p44 = por %p42, %p43
      %s46 = sadd.s32 %s45, 1
      %p49 = scmp.eq.s32.totalorder %s11, 1
      %p50 = scmp.ne.s32.totalorder %s45, %s47
      %p51 = scmp.eq.s32.totalorder %s11, 0
      %p52 = por %p50, %p51
      %p53 = scmp.ne.s32.totalorder %s45, %s47
      %p54 = scmp.eq.s32.totalorder %s16, 1
      %p55 = por %p53, %p54
      %p56 = scmp.ne.s32.totalorder %s47, %s48
      %p57 = scmp.eq.s32.totalorder %s16, 0
      %p58 = por %p56, %p57
      %p59 = scmp.ne.s32.totalorder %s47, %s48
      %p60 = scmp.eq.s32.totalorder %s17, 1
      %p61 = por %p59, %p60
      %p63 = scmp.ne.s32.totalorder %s48, %s62
      %p64 = scmp.eq.s32.totalorder %s17, 0
      %p65 = por %p63, %p64
      %s66 = ssub.s32 %s11, %s18
      %p67 = scmp.eq.s32.totalorder %s66, 0
      %s69 = sadd.s32 %s68, 1
      %s70 = scalar_select %p67, %s68, %s69
      %p73 = pneg %p67
      %p74 = scmp.eq.s32.totalorder %s11, 1
      %p75 = por %p73, %p74
      %p76 = scmp.ne.s32.totalorder %s68, %s71
      %p77 = scmp.eq.s32.totalorder %s11, 0
      %p78 = por %p76, %p77
      %p79 = scmp.ne.s32.totalorder %s68, %s71
      %p80 = scmp.eq.s32.totalorder %s16, 1
      %p81 = por %p79, %p80
      %p82 = scmp.ne.s32.totalorder %s71, %s72
      %p83 = scmp.eq.s32.totalorder %s16, 0
      %p84 = por %p82, %p83
      %p85 = scmp.ne.s32.totalorder %s71, %s72
      %p86 = scmp.eq.s32.totalorder %s17, 1
      %p87 = por %p85, %p86
      %p89 = scmp.ne.s32.totalorder %s72, %s88
      %p90 = scmp.eq.s32.totalorder %s17, 0
      %p91 = por %p89, %p90
      %p92 = scmp.le.s32.totalorder 1, %s11
      %p93 = scmp.lt.s32.totalorder %s11, 3
      %p94 = pnand %p92, %p93
      %p95 = pneg %p94
      // Predicated region
      $region9: #{tpu_custom_call.1} parent=5 // pred_check
        _
      $region10: #{tpu_custom_call.1} parent=5 // pred_check_branch
        %97 = sbr.rel (%p94) target = $region12
      $region11: #{tpu_custom_call.1} parent=5 // pred_region
        %s98 = ssub.s32 %s11, 1
        // Predicated region
        $region13: #{tpu_custom_call.1} parent=11 // pred_check
          %p99 = pneg %p58
        $region14: #{tpu_custom_call.1} parent=11 // pred_check_branch
          %101 = sbr.rel (%p99) target = $region16
        $region15: #{tpu_custom_call.1} parent=11 // pred_region
          _
        $region16: #{tpu_custom_call.1} parent=11 // pred_fallthru
          _
      $region12: #{tpu_custom_call.1} parent=5 // pred_fallthru
        _
      %p102 = scmp.lt.s32.totalorder %s11, 2
      // Predicated region
      $region17: #{tpu_custom_call.1} parent=5 // pred_check
        %p103 = pneg %p102
      $region18: #{tpu_custom_call.1} parent=5 // pred_check_branch
        %105 = sbr.rel (%p103) target = $region20
      $region19: #{tpu_custom_call.1} parent=5 // pred_region
        // Predicated region
        $region21: #{tpu_custom_call.1} parent=19 // pred_check
          %p106 = pneg %p31
        $region22: #{tpu_custom_call.1} parent=19 // pred_check_branch
          %108 = sbr.rel (%p106) target = $region24
        $region23: #{tpu_custom_call.1} parent=19 // pred_region
          %p109 = scmp.lt.s32.totalorder %s11, 1
          %s110 = scalar_select %p109, %s11, 1
          %s111 = smul.addr %s110, 8
          %s112 = scalar_lea.vmem %s0, %s111
        $region24: #{tpu_custom_call.1} parent=19 // pred_fallthru
          _
      $region20: #{tpu_custom_call.1} parent=5 // pred_fallthru
        _
      %p113 = scmp.le.s32.totalorder 1, %s11
      %p114 = scmp.lt.s32.totalorder %s11, 3
      %p115 = pnand %p113, %p114
      %p116 = pneg %p115
      // Predicated region
      $region25: #{tpu_custom_call.1} parent=5 // pred_check
        _
      $region26: #{tpu_custom_call.1} parent=5 // pred_check_branch
        %118 = sbr.rel (%p115) target = $region28
      $region27: #{tpu_custom_call.1} parent=5 // pred_region
        %s119 = ssub.s32 %s11, 1
        %p120 = scmp.lt.s32.totalorder %s16, 1
        %s121 = scalar_select %p120, %s16, 1
        %s122 = smul.addr %s121, 8
        %s123 = scalar_lea.vmem %s0, %s122
        %p124 = pneg %p37
        %p125 = pneg %p34
        %p126 = pneg %p58
        %p127 = pneg %p55
        %p128 = pneg %p84
        %p129 = pneg %p81
        %s130 = sand.u32 %s71, 1
        %s131 = scalar_lea.sflag [#allocation3], %s130
        %s132 = sand.u32 %s71, 1
        %s133 = smul.addr %s132, 8
        %s134 = scalar_lea.vmem [#allocation2], %s133
        %p135 = scmp.lt.s32.totalorder %s16, 1
        %s136 = scalar_select %p135, %s16, 1
        %s137 = smul.addr %s136, 8
        %s138 = scalar_lea.vmem %s0, %s137
        %v139 = vld [vmem:[%s138] sm:$0xff]
        %v140 = vld [vmem:[%s1] sm:$0x3f]
        %v141 = vld [vmem:[%s1 + $0x8] sm:$0x3f]
        %vm142 = vcmask 48128
        %v144 = vsel %vm142, %v139, 0
        %vm146 = vcmask 1045504
        %v148 = vsel %vm146, %v140, 0
        %v151 = vsel %vm146, %v141, 0
        %153 = vmatprep.subr.mxu0 %v151
        %154 = vmatpush1.msra.mxu0 %v148
        %155 = vmatprep.subr.mxu0 0.0
        %156 = vmatpush1.msra.mxu0 0.0
        %157 = vmatprep.subr.mxu0 0.0
        %158 = vmatpush1.msra.mxu0 0.0
        %159 = vmatprep.subr.mxu0 0.0
        %160 = vmatpush1.msra.mxu0 0.0
        %161 = vmatprep.subr.mxu0 0.0
        %162 = vmatpush1.msra.mxu0 0.0
        %163 = vmatprep.subr.mxu0 0.0
        %164 = vmatpush1.msra.mxu0 0.0
        %165 = vmatprep.subr.mxu0 0.0
        %166 = vmatpush1.msra.mxu0 0.0
        %167 = vmatprep.subr.mxu0 0.0
        %168 = vmatpush1.msra.mxu0 0.0
        %169 = vmatprep.subr.mxu0 0.0
        %170 = vmatpush1.msra.mxu0 0.0
        %171 = vmatprep.subr.mxu0 0.0
        %172 = vmatpush1.msra.mxu0 0.0
        %173 = vmatprep.subr.mxu0 0.0
        %174 = vmatpush1.msra.mxu0 0.0
        %175 = vmatprep.subr.mxu0 0.0
        %176 = vmatpush1.msra.mxu0 0.0
        %177 = vmatprep.subr.mxu0 0.0
        %178 = vmatpush1.msra.mxu0 0.0
        %179 = vmatprep.subr.mxu0 0.0
        %180 = vmatpush1.msra.mxu0 0.0
        %181 = vmatprep.subr.mxu0 0.0
        %182 = vmatpush1.msra.mxu0 0.0
        %183 = vmatprep.subr.mxu0 0.0
        %184 = vmatpush1.msra.mxu0 0.0
        %185 = vmatprep.subr.mxu0 0.0
        %186 = vmatpush1.msra.mxu0 0.0
        %187 = vmatprep.subr.mxu0 0.0
        %188 = vmatpush1.msra.mxu0 0.0
        %189 = vmatprep.subr.mxu0 0.0
        %190 = vmatpush1.msra.mxu0 0.0
        %191 = vmatprep.subr.mxu0 0.0
        %192 = vmatpush1.msra.mxu0 0.0
        %193 = vmatprep.subr.mxu0 0.0
        %194 = vmatpush1.msra.mxu0 0.0
        %195 = vmatprep.subr.mxu0 0.0
        %196 = vmatpush1.msra.mxu0 0.0
        %197 = vmatprep.subr.mxu0 0.0
        %198 = vmatpush1.msra.mxu0 0.0
        %199 = vmatprep.subr.mxu0 0.0
        %200 = vmatpush1.msra.mxu0 0.0
        %201 = vmatprep.subr.mxu0 0.0
        %202 = vmatpush1.msra.mxu0 0.0
        %203 = vmatprep.subr.mxu0 0.0
        %204 = vmatpush1.msra.mxu0 0.0
        %205 = vmatprep.subr.mxu0 0.0
        %206 = vmatpush1.msra.mxu0 0.0
        %207 = vmatprep.subr.mxu0 0.0
        %208 = vmatpush1.msra.mxu0 0.0
        %209 = vmatprep.subr.mxu0 0.0
        %210 = vmatpush1.msra.mxu0 0.0
        %211 = vmatprep.subr.mxu0 0.0
        %212 = vmatpush1.msra.mxu0 0.0
        %213 = vmatprep.subr.mxu0 0.0
        %214 = vmatpush1.msra.mxu0 0.0
        %215 = vmatprep.subr.mxu0 0.0
        %216 = vmatpush1.msra.mxu0 0.0
        %217 = vmatprep.mubr.f32.mxu0 0.0
        %218 = vmatmul.mubr.f32.gmra.mrb[0].mxu0 %v144
        %v219 = vpop.f32.mrb[0].mxu0
        %v220 = vadd.f32 0.0, %v219
        %v221 = vpop.f32.mrb[0].mxu0
        %v222 = vadd.f32 0.0, %v221
        %223 = vdwg.mxu0
        %v224 = vmin.f32 %v220, 0.0
        %v225 = vmul.f32 %v224, 1.442695
        %v226 = vpow.pop %v225
        %v227 = vand.u32 2147483647, %v222
        %vm228 = vcmp.le.f32.partialorder %v227, 0.7853982
        %vm229 = vcmp.lt.s32.totalorder %v222, 0
        %v230 = vand.u32 %v222, 2139095040
        %v231 = vshrl.u32 %v230, 23
        %v232 = vsub.s32 %v231, 127
        %v233 = vand.u32 2147483647, %v222
        %v234 = vand.u32 %v233, 8388607
        %v235 = vor.u32 %v234, 8388608
        %v236 = vsub.s32 0, %v235
        %v237 = vadd.s32 %v232, 1
        %vm238 = vcmp.gt.s32.totalorder %v237, 0
        %v239 = vsel %vm238, %v237, 0
        %v240 = vshrl.u32 %v239, 5
        %v241 = vand.u32 %v239, 31
        %v242 = vsub.s32 32, %v241
        %v243 = vshrl.u32 683565275, %v242
        %v244 = vshll.u32 683565275, %v241
        %v245 = vshrl.u32 2475754826, %v242
        %v246 = vor.u32 %v244, %v245
        %v247 = vshll.u32 2475754826, %v241
        %v248 = vshrl.u32 2131351028, %v242
        %v249 = vor.u32 %v247, %v248
        %v250 = vshll.u32 2131351028, %v241
        %v251 = vshrl.u32 2102212464, %v242
        %v252 = vor.u32 %v250, %v251
        %v253 = vshll.u32 2102212464, %v241
        %v254 = vshrl.u32 920167782, %v242
        %v255 = vor.u32 %v253, %v254
        %v256 = vshll.u32 920167782, %v241
        %v257 = vshrl.u32 1326507024, %v242
        %v258 = vor.u32 %v256, %v257
        %vm259 = vcmp.lt.s32.totalorder %v240, 1
        %vm260 = vcmp.lt.s32.totalorder %v240, 2
        %vm261 = vcmp.lt.s32.totalorder %v240, 3
        %vm262 = vcmp.lt.s32.totalorder %v240, 4
        %v263 = vsel %vm259, %v243, %v246
        %v264 = vsel %vm262, %v252, 2102212464
        %v265 = vsel %vm261, %v249, %v264
        %v266 = vsel %vm260, %v263, %v265
        %v267 = vsel %vm259, %v246, %v249
        %v268 = vsel %vm262, %v255, 920167782
        %v269 = vsel %vm261, %v252, %v268
        %v270 = vsel %vm260, %v267, %v269
        %v271 = vsel %vm259, %v249, %v252
        %v272 = vsel %vm262, %v258, 1326507024
        %v273 = vsel %vm261, %v255, %v272
        %v274 = vsel %vm260, %v271, %v273
        %v275 = vshll.u32 %v235, 8
        %v276 = vmul.u32.u64.compose %v275, %v274
        %v277 = vextract.low.u32 %v276
        %v278 = vextract.high.u32 %v276
        %v279 = vmul.u32.u64.compose %v275, %v270
        %v280 = vextract.low.u32 %v279
        %v281 = vextract.high.u32 %v279
        %v282 = vmul.u32 %v275, %v266
        %v283 = vadd.s32 %v278, %v280
        %vm284 = vc.u32 %v278, %v280
        %v285 = vadd.s32 %v281, 1
        %v286 = vsel %vm284, %v285, %v281
        %v287 = vadd.s32 %v282, %v286
        %v288 = vadd.s32 %v287, 536870912
        %v289 = vshrl.u32 %v288, 30
        %v290 = vshll.u32 %v289, 30
        %v291 = vsub.s32 %v287, %v290
        %vm292 = vcmp.lt.s32.totalorder %v291, 0
        %v293 = vsub.s32 0, %v291
        %v294 = vsel %vm292, %v293, %v291
        %v295 = vclz %v294
        %v296 = vsub.s32 %v295, 2
        %vm297 = vcmp.gt.s32.totalorder 0, %v296
        %v298 = vsel %vm297, 0, %v296
        %v299 = vsub.s32 32, %v298
        %v300 = vshll.u32 %v291, %v298
        %v301 = vshrl.u32 %v283, %v299
        %v302 = vor.u32 %v300, %v301
        %v303 = vsub.s32 4294967266, %v298
        %v304 = vadd.s32 %v303, 127
        %v305 = vshll.u32 %v304, 23
        %v306 = vor.u32 4788187, %v305
        %v307 = vand.u32 2147483647, %v306
        %v309 = vcvt.s32.f32 %v302
        %v310 = vmul.f32 %v309, %v307
        %v311 = vxor.u32 %v310, 2147483648
        %v312 = vsel %vm229, %v311, %v310
        %v313 = vsub.s32 4, %v289
        %v314 = vsel %vm229, %v313, %v289
        %v315 = vsel %vm228, %v222, %v312
        %v316 = vsel %vm228, 0, %v314
        %v317 = vcosq.f32.pop %v315
        %v318 = vsinq.f32.pop %v315
        %vm319 = vweird.f32 %v222
        %v320 = vadd.s32 %v316, 3
        %v321 = vand.u32 %v320, 3
        %vm322 = vcmp.lt.s32.totalorder %v321, 2
        %vm323 = vcmp.eq.s32.totalorder %v321, 0
        %v324 = vxor.u32 %v318, 2147483648
        %v325 = vsel %vm323, %v317, %v324
        %vm326 = vcmp.eq.s32.totalorder %v321, 2
        %v327 = vxor.u32 %v317, 2147483648
        %v328 = vsel %vm326, %v327, %v318
        %v329 = vsel %vm322, %v325, %v328
        %v330 = vsel %vm319, nan, %v329
        %v331 = vmul.f32 %v226, %v330
        %332 = vst [vmem:[%s134] sm:$0xff] %v331
        %s333 = sand.u32 %s71, 1
        %s334 = scalar_lea.sflag [#allocation3], %s333
        %s335 = sand.u32 %s71, 1
        %s336 = smul.addr %s335, 8
        %s337 = scalar_lea.vmem [#allocation2], %s336
        // Predicated region
        $region29: #{tpu_custom_call.1} parent=27 // pred_check
          %p338 = pneg %p81
        $region30: #{tpu_custom_call.1} parent=27 // pred_check_branch
          %340 = sbr.rel (%p338) target = $region32
        $region31: #{tpu_custom_call.1} parent=27 // pred_region
          %s342 = ssub.s32 128, 128
          %343 = vsyncadd %s334, %s342
          %s344 = smul.addr %s16, 128
          %s345 = scalar_lea.hbm %s2, %s344
          %s347 = sshll.u32 %s337, 4
          %s348 = int_to_ptr.vmem [resolvable:$true] %s347
          %350 = dma.vmem_to_hbm [thread:$0]  %s348, 128, %s345, %s334
        $region32: #{tpu_custom_call.1} parent=27 // pred_fallthru
          _
      $region28: #{tpu_custom_call.1} parent=5 // pred_fallthru
        _
      %p351 = scmp.le.s32.totalorder 2, %s11
      // Predicated region
      $region33: #{tpu_custom_call.1} parent=5 // pred_check
        %p352 = pneg %p351
      $region34: #{tpu_custom_call.1} parent=5 // pred_check_branch
        %354 = sbr.rel (%p352) target = $region36
      $region35: #{tpu_custom_call.1} parent=5 // pred_region
        %s355 = ssub.s32 %s11, 2
        // Predicated region
        $region37: #{tpu_custom_call.1} parent=35 // pred_check
          %p356 = pneg %p87
        $region38: #{tpu_custom_call.1} parent=35 // pred_check_branch
          %358 = sbr.rel (%p356) target = $region40
        $region39: #{tpu_custom_call.1} parent=35 // pred_region
          %s359 = sand.u32 %s72, 1
          %s360 = scalar_lea.sflag [#allocation3], %s359
          %s361 = sand.u32 %s72, 1
          %s362 = smul.addr %s361, 8
          %s363 = scalar_lea.vmem [#allocation2], %s362
          %364 = dma.done %s360, 128
        $region40: #{tpu_custom_call.1} parent=35 // pred_fallthru
          _
      $region36: #{tpu_custom_call.1} parent=5 // pred_fallthru
        _
    $region6: #{tpu_custom_call.1} parent=1 // loop_footer
      %s15 = sadd.s32 1, %s11
    $region7: #{tpu_custom_call.1} parent=1 // loop_footer_branch
      %10 = sbr.rel target = $region3
    $region8: #{tpu_custom_call.1} parent=1 // loop_exit
      _
    %365 = vsyncpa [#allocation3], 1
    %s366 = scalar_lea.sflag [#allocation3], 1
    %367 = vsyncpa %s366, 1

</llo_original>
